<compile_context>
chip_gen: v6e
topology: v6e:2x2x1
jax: 0.10.0
libtpu: 0.0.40
codegen_flags: <defaults>
</compile_context>

<pallas_src>
import functools

import numpy as np
import jax
import jax.numpy as jnp
from jax.experimental import pallas as pl
from jax.experimental.pallas import tpu as pltpu


def _round_up(x, m):
    return ((x + m - 1) // m) * m


def _cdiv(a, b):
    return (a + b - 1) // b


def _combined_loss_kernel(x_ref, lab_ref, o_ref, acc_ref, *,
                          c, band, rows_per_tile, hw_real, has_pad):
    """Accumulate CE / soft-Dice lane partial sums for one (rows, 128) tile.

    x_ref   : VMEM (N, C, R, 128)   logits tile (native dtype)
    lab_ref : VMEM (N, R, 128) i32  class labels (-1 marks padded pixels)
    o_ref   : VMEM (1, ROWS, 128)   per-core packed lane partial sums
    acc_ref : VMEM (ROWS, 128) f32  running accumulator:
                rows [0, c)              sum p*t   (dice intersection)
                rows [band, band+c)      sum p
                rows [2*band, 2*band+c)  sum t
                row  [3*band]            sum t*log_softmax(x)
    """
    j = pl.program_id(1)
    tiles_per_core = pl.num_programs(1)
    tile_idx = pl.program_id(0) * tiles_per_core + j

    @pl.when(j == 0)
    def _init():
        acc_ref[...] = jnp.zeros_like(acc_ref)

    def accumulate(masked):
        x = x_ref[...].astype(jnp.float32)           # (N, C, R, 128)
        lab = lab_ref[...]                           # (N, R, 128) int32

        # One-hot target rebuilt from integer labels (no f32 one-hot in HBM).
        # TODO(synk): iota could be built at (1, C, 1, 1) to save vregs.
        ch = jax.lax.broadcasted_iota(jnp.int32, x.shape, 1)
        tgt = (lab[:, None, :, :] == ch).astype(jnp.float32)   # (N,C,R,128)

        # Numerically stable softmax over channels (axis=1, a major axis).
        m = jnp.max(x, axis=1, keepdims=True)        # (N,1,R,128)
        ex = jnp.exp(x - m)                          # (N,C,R,128)
        denom = jnp.sum(ex, axis=1, keepdims=True)   # (N,1,R,128)
        p = ex * pl.reciprocal(denom, approx=False)  # (N,C,R,128)
        logd = jnp.log(denom)[:, 0]                  # (N,R,128)

        if masked:
            valid = (lab >= 0).astype(jnp.float32)   # (N,R,128)
            p = p * valid[:, None]                   # zero padded pixels
            logd = logd * valid

        # CE lane partial: sum(t*logp) = sum(t*(x-m)) - sum(valid*log(denom)).
        ce_pos = jnp.sum(jnp.sum(tgt * (x - m), axis=(0, 1)),
                         axis=0, keepdims=True)                  # (1,128)
        ce_neg = jnp.sum(jnp.sum(logd, axis=0), axis=0, keepdims=True)

        # Soft-Dice lane partials per class (sum over batch + rows).
        inter = jnp.sum(jnp.sum(p * tgt, axis=0), axis=1)        # (C,128)
        psum = jnp.sum(jnp.sum(p, axis=0), axis=1)               # (C,128)
        tsum = jnp.sum(jnp.sum(tgt, axis=0), axis=1)             # (C,128)

        acc_ref[0:c, :] += inter
        acc_ref[band:band + c, :] += psum
        acc_ref[2 * band:2 * band + c, :] += tsum
        acc_ref[3 * band:3 * band + 1, :] += ce_pos - ce_neg

    if has_pad:
        # Only tiles whose pixel range extends past the real H*W need masking.
        needs_mask = (tile_idx + 1) * (rows_per_tile * 128) > hw_real

        @pl.when(needs_mask)
        def _masked():
            accumulate(True)

        @pl.when(jnp.logical_not(needs_mask))
        def _unmasked():
            accumulate(False)
    else:
        accumulate(False)

    @pl.when(j == tiles_per_core - 1)
    def _store():
        o_ref[0] = acc_ref[...]


@functools.partial(jax.jit, static_argnames=("block_bytes", "n_split"))
def combined_loss(logits_nchw, labels_nhw, weights, *,
                  block_bytes=2 * 1024 * 1024, n_split=2):
    """CombinedLoss forward: w0 * CE(softmax) + w1 * soft-Dice.

    logits_nchw : (N, C, H, W) float logits (f32 or bf16; DMA'd natively)
    labels_nhw  : (N, H, W) integer class labels in [0, C)
    weights     : (2,) combination weights [w_ce, w_dice]
    block_bytes : f32-equivalent VMEM budget for one logits block
    n_split     : leading parallel grid axis (2 -> both TensorCores on v7x)
    """
    n, c, h, w = logits_nchw.shape
    hw = h * w
    r0 = _cdiv(hw, 128)

    # Tile geometry: lane-dense (rows, 128) minor dims, rows a multiple of 8,
    # sized from the VMEM byte budget so each grid step streams MiBs of logits.
    bytes_per_row = n * c * 128 * 4                        # f32-equivalent
    max_rows = max(8, (block_bytes // bytes_per_row) // 8 * 8)
    r0_pad8 = _round_up(max(r0, 1), 8)
    tiles_total = _round_up(_cdiv(r0_pad8, max_rows), n_split)
    tiles_per_core = tiles_total // n_split
    rows_per_tile = _round_up(_cdiv(r0_pad8, tiles_total), 8)
    r_pad = tiles_total * rows_per_tile
    hw_pad = r_pad * 128
    has_pad = hw_pad != hw

    # Contiguous reshapes only; the pad copy happens only for unaligned shapes.
    x = jnp.reshape(logits_nchw, (n, c, hw))
    lab = jnp.reshape(labels_nhw, (n, hw)).astype(jnp.int32)
    if has_pad:
        x = jnp.pad(x, ((0, 0), (0, 0), (0, hw_pad - hw)))
        lab = jnp.pad(lab, ((0, 0), (0, hw_pad - hw)), constant_values=-1)
    x = jnp.reshape(x, (n, c, r_pad, 128))
    lab = jnp.reshape(lab, (n, r_pad, 128))

    band = _round_up(c, 8)
    out_rows = 3 * band + 8

    kernel = functools.partial(
        _combined_loss_kernel, c=c, band=band, rows_per_tile=rows_per_tile,
        hw_real=hw, has_pad=has_pad)

    partials = pl.pallas_call(
        kernel,
        out_shape=jax.ShapeDtypeStruct((n_split, out_rows, 128), jnp.float32),
        grid=(n_split, tiles_per_core),
        in_specs=[
            pl.BlockSpec((n, c, rows_per_tile, 128),
                         lambda i, j: (0, 0, i * tiles_per_core + j, 0)),
            pl.BlockSpec((n, rows_per_tile, 128),
                         lambda i, j: (0, i * tiles_per_core + j, 0)),
        ],
        out_specs=pl.BlockSpec((1, out_rows, 128), lambda i, j: (i, 0, 0)),
        scratch_shapes=[pltpu.VMEM((out_rows, 128), jnp.float32)],
        compiler_params=pltpu.CompilerParams(
            dimension_semantics=("parallel", "arbitrary"),
            vmem_limit_bytes=48 * 1024 * 1024,   # <= v7x physical 64 MiB
        ),
    )(x, lab)

    # Tiny epilogue: cross-core + cross-lane reduce and final CE/Dice combine.
    sums = jnp.sum(partials, axis=(0, 2))                  # (out_rows,)
    inter = sums[0:c]
    psum = sums[band:band + c]
    tsum = sums[2 * band:2 * band + c]
    ce_sum = sums[3 * band]

    eps = 1e-6
    ce = -ce_sum / (n * hw)
    dice = (2.0 * inter + eps) / (psum + tsum + eps)
    dice_loss = 1.0 - jnp.mean(dice)
    wts = jnp.asarray(weights, jnp.float32)
    return wts[0] * ce + wts[1] * dice_loss


def _reference(logits_nchw, labels_nhw, weights, eps=1e-6):
    """Pure-JAX reference (CE over softmax + per-class soft-Dice)."""
    x = logits_nchw.astype(jnp.float32)
    n, c, h, w = x.shape
    t = jnp.transpose(jax.nn.one_hot(labels_nhw, c, dtype=jnp.float32),
                      (0, 3, 1, 2))
    logp = jax.nn.log_softmax(x, axis=1)
    p = jnp.exp(logp)
    ce = -jnp.sum(t * logp) / (n * h * w)
    inter = jnp.sum(p * t, axis=(0, 2, 3))
    denom = jnp.sum(p, axis=(0, 2, 3)) + jnp.sum(t, axis=(0, 2, 3))
    dice = (2.0 * inter + eps) / (denom + eps)
    dice_loss = 1.0 - jnp.mean(dice)
    wts = jnp.asarray(weights, jnp.float32)
    return wts[0] * ce + wts[1] * dice_loss


if __name__ == "__main__":
    # Deterministic "parameters" of CombinedLoss (__init__ weights).
    weights = np.array([0.6, 0.4], dtype=np.float32)
    key = jax.random.PRNGKey(0)

    def check(n, c, h, w, dtype, tol, **kw):
        kx, kt = jax.random.split(jax.random.fold_in(key, h * w + c))
        logits = jax.random.normal(kx, (n, c, h, w), dtype=jnp.float32)
        logits = logits.astype(dtype)
        labels = jax.random.randint(kt, (n, h, w), 0, c)
        loss = jax.block_until_ready(combined_loss(logits, labels, weights, **kw))
        ref = _reference(logits, labels, weights)
        assert np.allclose(np.asarray(loss), np.asarray(ref),
                           rtol=tol, atol=tol), \
            (n, c, h, w, str(dtype), float(loss), float(ref))

    check(2, 4, 16, 16, jnp.float32, 1e-5)    # primary shape (padded/masked)
    check(2, 4, 64, 64, jnp.float32, 1e-5)    # aligned, no padding, 1 tile/core
    check(2, 4, 64, 64, jnp.float32, 1e-5,
          block_bytes=32 * 1024)              # multi-tile streaming per core
    check(2, 4, 20, 20, jnp.float32, 1e-5)    # masked spatial tail
    check(2, 4, 16, 16, jnp.bfloat16, 1e-3)   # native bf16 DMA, f32 math

    print("KERNEL_OK")
</pallas_src>

<mosaic_0001>
module attributes {stable_mosaic.version = 11 : i64} {
  func.func @_combined_loss_kernel(%arg0: i32, %arg1: i32, %arg2: memref<2x4x8x128xf32, #tpu.memory_space<vmem>>, %arg3: memref<2x8x128xi32, #tpu.memory_space<vmem>>, %arg4: memref<1x32x128xf32, #tpu.memory_space<vmem>>, %arg5: memref<32x128xf32, #tpu.memory_space<vmem>>) attributes {dimension_semantics = [#tpu.dimension_semantics<parallel>, #tpu.dimension_semantics<arbitrary>], iteration_bounds = array<i64: 2, 1>, scalar_prefetch = 0 : i64, scratch_operands = 1 : i64, tpu.core_type = #tpu.core_type<tc>, window_params = [{transform_indices = @transform_0, window_bounds = array<i64: 2, 4, 8, 128>}, {transform_indices = @transform_1, window_bounds = array<i64: 2, 8, 128>}, {transform_indices = @transform_2, window_bounds = array<i64: 1, 32, 128>}]} {
    %c1_i32 = arith.constant 1 : i32
    %0 = arith.muli %arg0, %c1_i32 : i32
    %1 = arith.addi %0, %arg1 : i32
    %c0_i32 = arith.constant 0 : i32
    %2 = arith.cmpi eq, %arg1, %c0_i32 : i32
    %3 = arith.extui %2 : i1 to i32
    %c0_i32_0 = arith.constant 0 : i32
    %4 = arith.cmpi ne, %3, %c0_i32_0 : i32
    scf.if %4 {
      %cst = arith.constant 0.000000e+00 : f32
      %16 = vector.broadcast %cst : f32 to vector<32x128xf32>
      %c0 = arith.constant 0 : index
      %c0_6 = arith.constant 0 : index
      %17 = vector.load %arg5[%c0, %c0_6] : memref<32x128xf32, #tpu.memory_space<vmem>>, vector<32x128xf32>
      tpu.vector_store %arg5[%c0, %c0_6], %16 {strides = array<i32>} : memref<32x128xf32, #tpu.memory_space<vmem>>, vector<32x128xf32>,
    } else {
    }
    %c1_i32_1 = arith.constant 1 : i32
    %5 = arith.addi %1, %c1_i32_1 : i32
    %c1024_i32 = arith.constant 1024 : i32
    %6 = arith.muli %5, %c1024_i32 : i32
    %c256_i32 = arith.constant 256 : i32
    %7 = arith.cmpi sgt, %6, %c256_i32 : i32
    %8 = arith.extui %7 : i1 to i32
    %c0_i32_2 = arith.constant 0 : i32
    %9 = arith.cmpi ne, %8, %c0_i32_2 : i32
    scf.if %9 {
      %c0 = arith.constant 0 : index
      %c0_6 = arith.constant 0 : index
      %c0_7 = arith.constant 0 : index
      %c0_8 = arith.constant 0 : index
      %16 = vector.load %arg2[%c0, %c0_6, %c0_7, %c0_8] : memref<2x4x8x128xf32, #tpu.memory_space<vmem>>, vector<2x4x8x128xf32>
      %c0_9 = arith.constant 0 : index
      %c0_10 = arith.constant 0 : index
      %c0_11 = arith.constant 0 : index
      %17 = vector.load %arg3[%c0_9, %c0_10, %c0_11] : memref<2x8x128xi32, #tpu.memory_space<vmem>>, vector<2x8x128xi32>
      %18 = tpu.iota {dimensions = array<i32: 1>} : vector<2x4x8x128xi32>
      %19 = vector.shape_cast %17 : vector<2x8x128xi32> to vector<2x1x8x128xi32>
      %20 = vector.broadcast %19 : vector<2x1x8x128xi32> to vector<2x4x8x128xi32>
      %21 = arith.cmpi eq, %20, %18 : vector<2x4x8x128xi32>
      %22 = arith.extui %21 : vector<2x4x8x128xi1> to vector<2x4x8x128xi32>
      %23 = arith.sitofp %22 : vector<2x4x8x128xi32> to vector<2x4x8x128xf32>
      %cst = arith.constant dense<0xFF800000> : vector<2x8x128xf32>
      %24 = vector.multi_reduction <maximumf>, %16, %cst [1] : vector<2x4x8x128xf32> to vector<2x8x128xf32>
      %25 = vector.shape_cast %24 : vector<2x8x128xf32> to vector<2x1x8x128xf32>
      %26 = vector.broadcast %25 : vector<2x1x8x128xf32> to vector<2x4x8x128xf32>
      %27 = arith.subf %16, %26 : vector<2x4x8x128xf32>
      %28 = math.exp %27 : vector<2x4x8x128xf32>
      %cst_12 = arith.constant dense<0.000000e+00> : vector<2x8x128xf32>
      %29 = vector.multi_reduction <add>, %28, %cst_12 [1] : vector<2x4x8x128xf32> to vector<2x8x128xf32>
      %30 = vector.shape_cast %29 : vector<2x8x128xf32> to vector<2x1x8x128xf32>
      %31 = tpu.reciprocal %30 : vector<2x1x8x128xf32> -> vector<2x1x8x128xf32>
      %32 = vector.broadcast %31 : vector<2x1x8x128xf32> to vector<2x4x8x128xf32>
      %33 = arith.mulf %28, %32 : vector<2x4x8x128xf32>
      %34 = math.log %30 : vector<2x1x8x128xf32>
      %35 = vector.shape_cast %34 : vector<2x1x8x128xf32> to vector<2x8x128xf32>
      %c0_i32_13 = arith.constant 0 : i32
      %36 = vector.broadcast %c0_i32_13 : i32 to vector<2x8x128xi32>
      %37 = arith.cmpi sge, %17, %36 : vector<2x8x128xi32>
      %38 = arith.extui %37 : vector<2x8x128xi1> to vector<2x8x128xi32>
      %39 = arith.sitofp %38 : vector<2x8x128xi32> to vector<2x8x128xf32>
      %40 = vector.shape_cast %39 : vector<2x8x128xf32> to vector<2x1x8x128xf32>
      %41 = vector.broadcast %40 : vector<2x1x8x128xf32> to vector<2x4x8x128xf32>
      %42 = arith.mulf %33, %41 : vector<2x4x8x128xf32>
      %43 = arith.mulf %35, %39 : vector<2x8x128xf32>
      %44 = vector.broadcast %25 : vector<2x1x8x128xf32> to vector<2x4x8x128xf32>
      %45 = arith.subf %16, %44 : vector<2x4x8x128xf32>
      %46 = arith.mulf %23, %45 : vector<2x4x8x128xf32>
      %cst_14 = arith.constant dense<0.000000e+00> : vector<8x128xf32>
      %47 = vector.multi_reduction <add>, %46, %cst_14 [0, 1] : vector<2x4x8x128xf32> to vector<8x128xf32>
      %cst_15 = arith.constant dense<0.000000e+00> : vector<128xf32>
      %48 = vector.multi_reduction <add>, %47, %cst_15 [0] : vector<8x128xf32> to vector<128xf32>
      %49 = vector.shape_cast %48 : vector<128xf32> to vector<1x128xf32>
      %cst_16 = arith.constant dense<0.000000e+00> : vector<8x128xf32>
      %50 = vector.multi_reduction <add>, %43, %cst_16 [0] : vector<2x8x128xf32> to vector<8x128xf32>
      %cst_17 = arith.constant dense<0.000000e+00> : vector<128xf32>
      %51 = vector.multi_reduction <add>, %50, %cst_17 [0] : vector<8x128xf32> to vector<128xf32>
      %52 = vector.shape_cast %51 : vector<128xf32> to vector<1x128xf32>
      %53 = arith.mulf %42, %23 : vector<2x4x8x128xf32>
      %cst_18 = arith.constant dense<0.000000e+00> : vector<4x8x128xf32>
      %54 = vector.multi_reduction <add>, %53, %cst_18 [0] : vector<2x4x8x128xf32> to vector<4x8x128xf32>
      %cst_19 = arith.constant dense<0.000000e+00> : vector<4x128xf32>
      %55 = vector.multi_reduction <add>, %54, %cst_19 [1] : vector<4x8x128xf32> to vector<4x128xf32>
      %cst_20 = arith.constant dense<0.000000e+00> : vector<4x8x128xf32>
      %56 = vector.multi_reduction <add>, %42, %cst_20 [0] : vector<2x4x8x128xf32> to vector<4x8x128xf32>
      %cst_21 = arith.constant dense<0.000000e+00> : vector<4x128xf32>
      %57 = vector.multi_reduction <add>, %56, %cst_21 [1] : vector<4x8x128xf32> to vector<4x128xf32>
      %cst_22 = arith.constant dense<0.000000e+00> : vector<4x8x128xf32>
      %58 = vector.multi_reduction <add>, %23, %cst_22 [0] : vector<2x4x8x128xf32> to vector<4x8x128xf32>
      %cst_23 = arith.constant dense<0.000000e+00> : vector<4x128xf32>
      %59 = vector.multi_reduction <add>, %58, %cst_23 [1] : vector<4x8x128xf32> to vector<4x128xf32>
      %c0_24 = arith.constant 0 : index
      %c0_25 = arith.constant 0 : index
      %60 = vector.load %arg5[%c0_24, %c0_25] : memref<32x128xf32, #tpu.memory_space<vmem>>, vector<4x128xf32>
      %61 = arith.addf %60, %55 : vector<4x128xf32>
      %c0_26 = arith.constant 0 : index
      %c0_27 = arith.constant 0 : index
      %62 = vector.load %arg5[%c0_26, %c0_27] : memref<32x128xf32, #tpu.memory_space<vmem>>, vector<4x128xf32>
      tpu.vector_store %arg5[%c0_26, %c0_27], %61 {strides = array<i32>} : memref<32x128xf32, #tpu.memory_space<vmem>>, vector<4x128xf32>,
      %c8 = arith.constant 8 : index
      %c0_28 = arith.constant 0 : index
      %63 = vector.load %arg5[%c8, %c0_28] : memref<32x128xf32, #tpu.memory_space<vmem>>, vector<4x128xf32>
      %64 = arith.addf %63, %57 : vector<4x128xf32>
      %c8_29 = arith.constant 8 : index
      %c0_30 = arith.constant 0 : index
      %65 = vector.load %arg5[%c8_29, %c0_30] : memref<32x128xf32, #tpu.memory_space<vmem>>, vector<4x128xf32>
      tpu.vector_store %arg5[%c8_29, %c0_30], %64 {strides = array<i32>} : memref<32x128xf32, #tpu.memory_space<vmem>>, vector<4x128xf32>,
      %c16 = arith.constant 16 : index
      %c0_31 = arith.constant 0 : index
      %66 = vector.load %arg5[%c16, %c0_31] : memref<32x128xf32, #tpu.memory_space<vmem>>, vector<4x128xf32>
      %67 = arith.addf %66, %59 : vector<4x128xf32>
      %c16_32 = arith.constant 16 : index
      %c0_33 = arith.constant 0 : index
      %68 = vector.load %arg5[%c16_32, %c0_33] : memref<32x128xf32, #tpu.memory_space<vmem>>, vector<4x128xf32>
      tpu.vector_store %arg5[%c16_32, %c0_33], %67 {strides = array<i32>} : memref<32x128xf32, #tpu.memory_space<vmem>>, vector<4x128xf32>,
      %c24 = arith.constant 24 : index
      %c0_34 = arith.constant 0 : index
      %69 = vector.load %arg5[%c24, %c0_34] : memref<32x128xf32, #tpu.memory_space<vmem>>, vector<1x128xf32>
      %70 = arith.subf %49, %52 : vector<1x128xf32>
      %71 = arith.addf %69, %70 : vector<1x128xf32>
      %c24_35 = arith.constant 24 : index
      %c0_36 = arith.constant 0 : index
      %72 = vector.load %arg5[%c24_35, %c0_36] : memref<32x128xf32, #tpu.memory_space<vmem>>, vector<1x128xf32>
      tpu.vector_store %arg5[%c24_35, %c0_36], %71 {strides = array<i32>} : memref<32x128xf32, #tpu.memory_space<vmem>>, vector<1x128xf32>,
    } else {
    }
    %true = arith.constant true
    %10 = arith.xori %7, %true : i1
    %11 = arith.extui %10 : i1 to i32
    %c0_i32_3 = arith.constant 0 : i32
    %12 = arith.cmpi ne, %11, %c0_i32_3 : i32
    scf.if %12 {
      %c0 = arith.constant 0 : index
      %c0_6 = arith.constant 0 : index
      %c0_7 = arith.constant 0 : index
      %c0_8 = arith.constant 0 : index
      %16 = vector.load %arg2[%c0, %c0_6, %c0_7, %c0_8] : memref<2x4x8x128xf32, #tpu.memory_space<vmem>>, vector<2x4x8x128xf32>
      %c0_9 = arith.constant 0 : index
      %c0_10 = arith.constant 0 : index
      %c0_11 = arith.constant 0 : index
      %17 = vector.load %arg3[%c0_9, %c0_10, %c0_11] : memref<2x8x128xi32, #tpu.memory_space<vmem>>, vector<2x8x128xi32>
      %18 = tpu.iota {dimensions = array<i32: 1>} : vector<2x4x8x128xi32>
      %19 = vector.shape_cast %17 : vector<2x8x128xi32> to vector<2x1x8x128xi32>
      %20 = vector.broadcast %19 : vector<2x1x8x128xi32> to vector<2x4x8x128xi32>
      %21 = arith.cmpi eq, %20, %18 : vector<2x4x8x128xi32>
      %22 = arith.extui %21 : vector<2x4x8x128xi1> to vector<2x4x8x128xi32>
      %23 = arith.sitofp %22 : vector<2x4x8x128xi32> to vector<2x4x8x128xf32>
      %cst = arith.constant dense<0xFF800000> : vector<2x8x128xf32>
      %24 = vector.multi_reduction <maximumf>, %16, %cst [1] : vector<2x4x8x128xf32> to vector<2x8x128xf32>
      %25 = vector.shape_cast %24 : vector<2x8x128xf32> to vector<2x1x8x128xf32>
      %26 = vector.broadcast %25 : vector<2x1x8x128xf32> to vector<2x4x8x128xf32>
      %27 = arith.subf %16, %26 : vector<2x4x8x128xf32>
      %28 = math.exp %27 : vector<2x4x8x128xf32>
      %cst_12 = arith.constant dense<0.000000e+00> : vector<2x8x128xf32>
      %29 = vector.multi_reduction <add>, %28, %cst_12 [1] : vector<2x4x8x128xf32> to vector<2x8x128xf32>
      %30 = vector.shape_cast %29 : vector<2x8x128xf32> to vector<2x1x8x128xf32>
      %31 = tpu.reciprocal %30 : vector<2x1x8x128xf32> -> vector<2x1x8x128xf32>
      %32 = vector.broadcast %31 : vector<2x1x8x128xf32> to vector<2x4x8x128xf32>
      %33 = arith.mulf %28, %32 : vector<2x4x8x128xf32>
      %34 = math.log %30 : vector<2x1x8x128xf32>
      %35 = vector.shape_cast %34 : vector<2x1x8x128xf32> to vector<2x8x128xf32>
      %36 = vector.broadcast %25 : vector<2x1x8x128xf32> to vector<2x4x8x128xf32>
      %37 = arith.subf %16, %36 : vector<2x4x8x128xf32>
      %38 = arith.mulf %23, %37 : vector<2x4x8x128xf32>
      %cst_13 = arith.constant dense<0.000000e+00> : vector<8x128xf32>
      %39 = vector.multi_reduction <add>, %38, %cst_13 [0, 1] : vector<2x4x8x128xf32> to vector<8x128xf32>
      %cst_14 = arith.constant dense<0.000000e+00> : vector<128xf32>
      %40 = vector.multi_reduction <add>, %39, %cst_14 [0] : vector<8x128xf32> to vector<128xf32>
      %41 = vector.shape_cast %40 : vector<128xf32> to vector<1x128xf32>
      %cst_15 = arith.constant dense<0.000000e+00> : vector<8x128xf32>
      %42 = vector.multi_reduction <add>, %35, %cst_15 [0] : vector<2x8x128xf32> to vector<8x128xf32>
      %cst_16 = arith.constant dense<0.000000e+00> : vector<128xf32>
      %43 = vector.multi_reduction <add>, %42, %cst_16 [0] : vector<8x128xf32> to vector<128xf32>
      %44 = vector.shape_cast %43 : vector<128xf32> to vector<1x128xf32>
      %45 = arith.mulf %33, %23 : vector<2x4x8x128xf32>
      %cst_17 = arith.constant dense<0.000000e+00> : vector<4x8x128xf32>
      %46 = vector.multi_reduction <add>, %45, %cst_17 [0] : vector<2x4x8x128xf32> to vector<4x8x128xf32>
      %cst_18 = arith.constant dense<0.000000e+00> : vector<4x128xf32>
      %47 = vector.multi_reduction <add>, %46, %cst_18 [1] : vector<4x8x128xf32> to vector<4x128xf32>
      %cst_19 = arith.constant dense<0.000000e+00> : vector<4x8x128xf32>
      %48 = vector.multi_reduction <add>, %33, %cst_19 [0] : vector<2x4x8x128xf32> to vector<4x8x128xf32>
      %cst_20 = arith.constant dense<0.000000e+00> : vector<4x128xf32>
      %49 = vector.multi_reduction <add>, %48, %cst_20 [1] : vector<4x8x128xf32> to vector<4x128xf32>
      %cst_21 = arith.constant dense<0.000000e+00> : vector<4x8x128xf32>
      %50 = vector.multi_reduction <add>, %23, %cst_21 [0] : vector<2x4x8x128xf32> to vector<4x8x128xf32>
      %cst_22 = arith.constant dense<0.000000e+00> : vector<4x128xf32>
      %51 = vector.multi_reduction <add>, %50, %cst_22 [1] : vector<4x8x128xf32> to vector<4x128xf32>
      %c0_23 = arith.constant 0 : index
      %c0_24 = arith.constant 0 : index
      %52 = vector.load %arg5[%c0_23, %c0_24] : memref<32x128xf32, #tpu.memory_space<vmem>>, vector<4x128xf32>
      %53 = arith.addf %52, %47 : vector<4x128xf32>
      %c0_25 = arith.constant 0 : index
      %c0_26 = arith.constant 0 : index
      %54 = vector.load %arg5[%c0_25, %c0_26] : memref<32x128xf32, #tpu.memory_space<vmem>>, vector<4x128xf32>
      tpu.vector_store %arg5[%c0_25, %c0_26], %53 {strides = array<i32>} : memref<32x128xf32, #tpu.memory_space<vmem>>, vector<4x128xf32>,
      %c8 = arith.constant 8 : index
      %c0_27 = arith.constant 0 : index
      %55 = vector.load %arg5[%c8, %c0_27] : memref<32x128xf32, #tpu.memory_space<vmem>>, vector<4x128xf32>
      %56 = arith.addf %55, %49 : vector<4x128xf32>
      %c8_28 = arith.constant 8 : index
      %c0_29 = arith.constant 0 : index
      %57 = vector.load %arg5[%c8_28, %c0_29] : memref<32x128xf32, #tpu.memory_space<vmem>>, vector<4x128xf32>
      tpu.vector_store %arg5[%c8_28, %c0_29], %56 {strides = array<i32>} : memref<32x128xf32, #tpu.memory_space<vmem>>, vector<4x128xf32>,
      %c16 = arith.constant 16 : index
      %c0_30 = arith.constant 0 : index
      %58 = vector.load %arg5[%c16, %c0_30] : memref<32x128xf32, #tpu.memory_space<vmem>>, vector<4x128xf32>
      %59 = arith.addf %58, %51 : vector<4x128xf32>
      %c16_31 = arith.constant 16 : index
      %c0_32 = arith.constant 0 : index
      %60 = vector.load %arg5[%c16_31, %c0_32] : memref<32x128xf32, #tpu.memory_space<vmem>>, vector<4x128xf32>
      tpu.vector_store %arg5[%c16_31, %c0_32], %59 {strides = array<i32>} : memref<32x128xf32, #tpu.memory_space<vmem>>, vector<4x128xf32>,
      %c24 = arith.constant 24 : index
      %c0_33 = arith.constant 0 : index
      %61 = vector.load %arg5[%c24, %c0_33] : memref<32x128xf32, #tpu.memory_space<vmem>>, vector<1x128xf32>
      %62 = arith.subf %41, %44 : vector<1x128xf32>
      %63 = arith.addf %61, %62 : vector<1x128xf32>
      %c24_34 = arith.constant 24 : index
      %c0_35 = arith.constant 0 : index
      %64 = vector.load %arg5[%c24_34, %c0_35] : memref<32x128xf32, #tpu.memory_space<vmem>>, vector<1x128xf32>
      tpu.vector_store %arg5[%c24_34, %c0_35], %63 {strides = array<i32>} : memref<32x128xf32, #tpu.memory_space<vmem>>, vector<1x128xf32>,
    } else {
    }
    %c0_i32_4 = arith.constant 0 : i32
    %13 = arith.cmpi eq, %arg1, %c0_i32_4 : i32
    %14 = arith.extui %13 : i1 to i32
    %c0_i32_5 = arith.constant 0 : i32
    %15 = arith.cmpi ne, %14, %c0_i32_5 : i32
    scf.if %15 {
      %c0 = arith.constant 0 : index
      %c0_6 = arith.constant 0 : index
      %16 = vector.load %arg5[%c0, %c0_6] : memref<32x128xf32, #tpu.memory_space<vmem>>, vector<32x128xf32>
      %c0_7 = arith.constant 0 : index
      %c0_8 = arith.constant 0 : index
      %c0_9 = arith.constant 0 : index
      %17 = vector.load %arg4[%c0_7, %c0_8, %c0_9] : memref<1x32x128xf32, #tpu.memory_space<vmem>>, vector<1x32x128xf32>
      %18 = vector.shape_cast %17 : vector<1x32x128xf32> to vector<32x128xf32>
      %19 = vector.shape_cast %16 : vector<32x128xf32> to vector<1x32x128xf32>
      tpu.vector_store %arg4[%c0_7, %c0_8, %c0_9], %19 {strides = array<i32>} : memref<1x32x128xf32, #tpu.memory_space<vmem>>, vector<1x32x128xf32>,
    } else {
    }
    return
  }
  func.func @transform_0(%arg0: i32, %arg1: i32) -> (i32, i32, i32, i32) {
    %c1_i32 = arith.constant 1 : i32
    %0 = arith.muli %arg0, %c1_i32 : i32
    %1 = arith.addi %0, %arg1 : i32
    %c0_i32 = arith.constant 0 : i32
    %c0_i32_0 = arith.constant 0 : i32
    %c0_i32_1 = arith.constant 0 : i32
    %c0_i32_2 = arith.constant 0 : i32
    return %c0_i32, %c0_i32_0, %1, %c0_i32_1 : i32, i32, i32, i32
  }
  func.func @transform_1(%arg0: i32, %arg1: i32) -> (i32, i32, i32) {
    %c1_i32 = arith.constant 1 : i32
    %0 = arith.muli %arg0, %c1_i32 : i32
    %1 = arith.addi %0, %arg1 : i32
    %c0_i32 = arith.constant 0 : i32
    %c0_i32_0 = arith.constant 0 : i32
    %c0_i32_1 = arith.constant 0 : i32
    return %c0_i32, %1, %c0_i32_0 : i32, i32, i32
  }
  func.func @transform_2(%arg0: i32, %arg1: i32) -> (i32, i32, i32) {
    %c0_i32 = arith.constant 0 : i32
    %c0_i32_0 = arith.constant 0 : i32
    %c0_i32_1 = arith.constant 0 : i32
    return %arg0, %c0_i32, %c0_i32_0 : i32, i32, i32
  }
}

</mosaic_0001>

<llo_original>
// kernel: combined_loss.1
$region0: #{combined_loss.1}
  #allocation0 [shape = 'u32[]', space=smem, size = 0x4, offset = 0x4, fixed_abs, tag = 'smem constant byte address 0x4 - core index']
  #allocation1 [shape = 'u32[144,128]{1,0:T(1,128)}', space=vmem, size = 0x12000, scoped, tag = 'internal scratch']
  #allocation2 [shape = 'f32[32,128]{1,0:T(8,128)}', space=vmem, size = 0x4000, scoped, tag = 'scratch operand']
  %s0 = inlined_call_operand.vmem [shape: f32[2,4,16,128], index: 0, kind: input, shape index: {}]
  %s1 = inlined_call_operand.vmem [shape: s32[2,16,128], index: 1, kind: input, shape index: {}]
  %s2 = inlined_call_operand.vmem [shape: f32[2,32,128], index: 2, kind: output, shape index: {}]
  %s3 = sld [smem:[#allocation0]]
  $region133: #{combined_loss.1} parent=0
    _
  %s5 = ssub.s32 1, %s3
  %s6 = scalar_select 0, %s5, %s3
  $region1: #{combined_loss.1} parent=0
    #allocation3 [shape = 'u8[65536]{0}', space=vmem, size = 0x10000, scoped, tag = 'input window, operand 0']
    #allocation4 [shape = 'u8[16384]{0}', space=vmem, size = 0x4000, scoped, tag = 'input window, operand 1']
    loop: start=0, step=1, limit=4
    $region2: #{combined_loss.1} parent=1 // loop_pre_header
      _
    $region3: #{combined_loss.1} parent=1 // loop_header
      %s8 = sphi 0, %s12
      %p9 = scmp.ge.s32.totalorder %s8, 4
      %s15 = sphi 0, %s27
      %s16 = sphi 0, %s23
      %s17 = sphi 0, %s15
      %s18 = sphi 0, %s16
      %s19 = sphi 0, %s17
      %s20 = sphi 0, %s18
      %s32 = sphi 0, %s34
      %s35 = sphi 0, %s32
      %s36 = sphi 0, %s35
      %s52 = sphi 0, %s36
      %s60 = sphi 0, %s62
      %s63 = sphi 0, %s60
      %s64 = sphi 0, %s63
      %s80 = sphi 0, %s64
      %s86 = sphi 0, %s88
      %s89 = sphi 0, %s86
      %s90 = sphi 0, %s89
      %s106 = sphi 0, %s90
    $region4: #{combined_loss.1} parent=1 // loop_header_branch
      %11 = sbr.rel (%p9) target = $region8
    $region5: #{combined_loss.1} parent=1 // loop_body
      %s13 = ssub.s32 %s8, 1
      %s14 = ssub.s32 %s8, 2
      %s21 = sadd.s32 1, %s16
      %p22 = scmp.ge.s32.totalorder %s21, 1
      %s23 = scalar_select %p22, 0, %s21
      %s24 = sadd.s32 1, %s15
      %s25 = scalar_select %p22, %s24, %s15
      %p26 = scmp.ge.s32.totalorder %s25, 2
      %s27 = scalar_select %p26, 0, %s25
      %s28 = sadd.s32 %s15, %s16
      %s29 = sadd.s32 %s27, %s23
      %s30 = ssub.s32 %s28, %s29
      %p31 = scmp.eq.s32.totalorder %s30, 0
      %s33 = sadd.s32 %s32, 1
      %s34 = scalar_select %p31, %s32, %s33
      %p37 = pneg %p31
      %p38 = scmp.eq.s32.totalorder %s8, 1
      %p39 = por %p37, %p38
      %p40 = scmp.ne.s32.totalorder %s32, %s35
      %p41 = scmp.eq.s32.totalorder %s8, 0
      %p42 = por %p40, %p41
      %p43 = scmp.ne.s32.totalorder %s32, %s35
      %p44 = scmp.eq.s32.totalorder %s13, 1
      %p45 = por %p43, %p44
      %p46 = scmp.ne.s32.totalorder %s35, %s36
      %p47 = scmp.eq.s32.totalorder %s13, 0
      %p48 = por %p46, %p47
      %p49 = scmp.ne.s32.totalorder %s35, %s36
      %p50 = scmp.eq.s32.totalorder %s14, 1
      %p51 = por %p49, %p50
      %p53 = scmp.ne.s32.totalorder %s36, %s52
      %p54 = scmp.eq.s32.totalorder %s14, 0
      %p55 = por %p53, %p54
      %s56 = sadd.s32 %s15, %s16
      %s57 = sadd.s32 %s27, %s23
      %s58 = ssub.s32 %s56, %s57
      %p59 = scmp.eq.s32.totalorder %s58, 0
      %s61 = sadd.s32 %s60, 1
      %s62 = scalar_select %p59, %s60, %s61
      %p65 = pneg %p59
      %p66 = scmp.eq.s32.totalorder %s8, 1
      %p67 = por %p65, %p66
      %p68 = scmp.ne.s32.totalorder %s60, %s63
      %p69 = scmp.eq.s32.totalorder %s8, 0
      %p70 = por %p68, %p69
      %p71 = scmp.ne.s32.totalorder %s60, %s63
      %p72 = scmp.eq.s32.totalorder %s13, 1
      %p73 = por %p71, %p72
      %p74 = scmp.ne.s32.totalorder %s63, %s64
      %p75 = scmp.eq.s32.totalorder %s13, 0
      %p76 = por %p74, %p75
      %p77 = scmp.ne.s32.totalorder %s63, %s64
      %p78 = scmp.eq.s32.totalorder %s14, 1
      %p79 = por %p77, %p78
      %p81 = scmp.ne.s32.totalorder %s64, %s80
      %p82 = scmp.eq.s32.totalorder %s14, 0
      %p83 = por %p81, %p82
      %s84 = ssub.s32 %s15, %s27
      %p85 = scmp.eq.s32.totalorder %s84, 0
      %s87 = sadd.s32 %s86, 1
      %s88 = scalar_select %p85, %s86, %s87
      %p91 = pneg %p85
      %p92 = scmp.eq.s32.totalorder %s8, 1
      %p93 = por %p91, %p92
      %p94 = scmp.ne.s32.totalorder %s86, %s89
      %p95 = scmp.eq.s32.totalorder %s8, 0
      %p96 = por %p94, %p95
      %p97 = scmp.ne.s32.totalorder %s86, %s89
      %p98 = scmp.eq.s32.totalorder %s13, 1
      %p99 = por %p97, %p98
      %p100 = scmp.ne.s32.totalorder %s89, %s90
      %p101 = scmp.eq.s32.totalorder %s13, 0
      %p102 = por %p100, %p101
      %p103 = scmp.ne.s32.totalorder %s89, %s90
      %p104 = scmp.eq.s32.totalorder %s14, 1
      %p105 = por %p103, %p104
      %p107 = scmp.ne.s32.totalorder %s90, %s106
      %p108 = scmp.eq.s32.totalorder %s14, 0
      %p109 = por %p107, %p108
      %p110 = scmp.le.s32.totalorder 1, %s8
      %p111 = scmp.lt.s32.totalorder %s8, 3
      %p112 = pnand %p110, %p111
      %p113 = pneg %p112
      // Predicated region
      $region9: #{combined_loss.1} parent=5 // pred_check
        _
      $region10: #{combined_loss.1} parent=5 // pred_check_branch
        %115 = sbr.rel (%p112) target = $region12
      $region11: #{combined_loss.1} parent=5 // pred_region
        %s116 = ssub.s32 %s8, 1
      $region12: #{combined_loss.1} parent=5 // pred_fallthru
        _
      %p117 = scmp.lt.s32.totalorder %s8, 2
      // Predicated region
      $region13: #{combined_loss.1} parent=5 // pred_check
        %p118 = pneg %p117
      $region14: #{combined_loss.1} parent=5 // pred_check_branch
        %120 = sbr.rel (%p118) target = $region16
      $region15: #{combined_loss.1} parent=5 // pred_region
        // Predicated region
        $region17: #{combined_loss.1} parent=15 // pred_check
          %p121 = pneg %p42
        $region18: #{combined_loss.1} parent=15 // pred_check_branch
          %123 = sbr.rel (%p121) target = $region20
        $region19: #{combined_loss.1} parent=15 // pred_region
          %s124 = sand.u32 %s32, 1
          %s125 = sand.u32 %s32, 1
          %s126 = smul.addr %s125, 64
          %s127 = scalar_lea.vmem [#allocation3], %s126
          %s128 = sadd.s32 %s15, %s16
          %s129 = smul.addr %s128, 8
          %s130 = scalar_lea.vmem %s0, %s129
          // Predicated region
          $region21: #{combined_loss.1} parent=19 // pred_check
            _
          $region22: #{combined_loss.1} parent=19 // pred_check_branch
            %132 = sbr.rel (0) target = $region24
          $region23: #{combined_loss.1} parent=19 // pred_region
            // Predicated region
            $region25: #{combined_loss.1} parent=23 // pred_check
              _
            $region26: #{combined_loss.1} parent=23 // pred_check_branch
              %134 = sbr.rel (0) target = $region28
            $region27: #{combined_loss.1} parent=23 // pred_region
              // Predicated region
              $region40: #{combined_loss.1} parent=27 // pred_check
                _
              $region41: #{combined_loss.1} parent=27 // pred_check_branch
                %164 = sbr.rel (0) target = $region43
              $region42: #{combined_loss.1} parent=27 // pred_region
                loop: start=0, step=1, limit=1
                $region44: #{combined_loss.1} parent=42 // loop_pre_header
                  _
                $region45: #{combined_loss.1} parent=42 // loop_header
                  %s166 = sphi 0, %s170
                  %p167 = scmp.ge.s32.totalorder %s166, 1
                  %s171 = sphi %s130, %s130
                  %s172 = sphi %s127, %s127
                $region46: #{combined_loss.1} parent=42 // loop_header_branch
                  %169 = sbr.rel (%p167) target = $region50
                $region47: #{combined_loss.1} parent=42 // loop_body
                  %v173 = vld [vmem:[%s171] sm:$0xff]
                  %174 = vst [vmem:[%s172] sm:$0xff] %v173
                  %v175 = vld [vmem:[%s171 + $0x10] sm:$0xff]
                  %176 = vst [vmem:[%s172 + $0x8] sm:$0xff] %v175
                  %v177 = vld [vmem:[%s171 + $0x20] sm:$0xff]
                  %178 = vst [vmem:[%s172 + $0x10] sm:$0xff] %v177
                  %v179 = vld [vmem:[%s171 + $0x30] sm:$0xff]
                  %180 = vst [vmem:[%s172 + $0x18] sm:$0xff] %v179
                  %v181 = vld [vmem:[%s171 + $0x40] sm:$0xff]
                  %182 = vst [vmem:[%s172 + $0x20] sm:$0xff] %v181
                  %v183 = vld [vmem:[%s171 + $0x50] sm:$0xff]
                  %184 = vst [vmem:[%s172 + $0x28] sm:$0xff] %v183
                  %v185 = vld [vmem:[%s171 + $0x60] sm:$0xff]
                  %186 = vst [vmem:[%s172 + $0x30] sm:$0xff] %v185
                  %v187 = vld [vmem:[%s171 + $0x70] sm:$0xff]
                  %188 = vst [vmem:[%s172 + $0x38] sm:$0xff] %v187
                $region48: #{combined_loss.1} parent=42 // loop_footer
                  %s170 = sadd.s32 1, %s166
                $region49: #{combined_loss.1} parent=42 // loop_footer_branch
                  %165 = sbr.rel target = $region45
                $region50: #{combined_loss.1} parent=42 // loop_exit
                  _
              $region43: #{combined_loss.1} parent=27 // pred_fallthru
                _
              // Predicated region
              $region51: #{combined_loss.1} parent=27 // pred_check
                _
              $region52: #{combined_loss.1} parent=27 // pred_check_branch
                %190 = sbr.rel target = $region54
              $region53: #{combined_loss.1} parent=27 // pred_region
                _
              $region54: #{combined_loss.1} parent=27 // pred_fallthru
                _
            $region28: #{combined_loss.1} parent=23 // pred_fallthru
              _
            // Predicated region
            $region29: #{combined_loss.1} parent=23 // pred_check
              _
            $region30: #{combined_loss.1} parent=23 // pred_check_branch
              %136 = sbr.rel target = $region32
            $region31: #{combined_loss.1} parent=23 // pred_region
              %s138 = ssub.s32 256, 1
              loop: start=0, step=1, limit=1
              $region33: #{combined_loss.1} parent=31 // loop_pre_header
                _
              $region34: #{combined_loss.1} parent=31 // loop_header
                %s140 = sphi 0, %s144
                %p141 = scmp.ge.s32.totalorder %s140, 1
                %s145 = sphi %s130, %s130
                %s146 = sphi %s127, %s127
              $region35: #{combined_loss.1} parent=31 // loop_header_branch
                %143 = sbr.rel (%p141) target = $region39
              $region36: #{combined_loss.1} parent=31 // loop_body
                %v147 = vld [vmem:[%s145] sm:%s138]
                %148 = vst [vmem:[%s146] sm:%s138] %v147
                %v149 = vld [vmem:[%s145 + $0x10] sm:%s138]
                %150 = vst [vmem:[%s146 + $0x8] sm:%s138] %v149
                %v151 = vld [vmem:[%s145 + $0x20] sm:%s138]
                %152 = vst [vmem:[%s146 + $0x10] sm:%s138] %v151
                %v153 = vld [vmem:[%s145 + $0x30] sm:%s138]
                %154 = vst [vmem:[%s146 + $0x18] sm:%s138] %v153
                %v155 = vld [vmem:[%s145 + $0x40] sm:%s138]
                %156 = vst [vmem:[%s146 + $0x20] sm:%s138] %v155
                %v157 = vld [vmem:[%s145 + $0x50] sm:%s138]
                %158 = vst [vmem:[%s146 + $0x28] sm:%s138] %v157
                %v159 = vld [vmem:[%s145 + $0x60] sm:%s138]
                %160 = vst [vmem:[%s146 + $0x30] sm:%s138] %v159
                %v161 = vld [vmem:[%s145 + $0x70] sm:%s138]
                %162 = vst [vmem:[%s146 + $0x38] sm:%s138] %v161
              $region37: #{combined_loss.1} parent=31 // loop_footer
                %s144 = sadd.s32 1, %s140
              $region38: #{combined_loss.1} parent=31 // loop_footer_branch
                %139 = sbr.rel target = $region34
              $region39: #{combined_loss.1} parent=31 // loop_exit
                _
            $region32: #{combined_loss.1} parent=23 // pred_fallthru
              _
          $region24: #{combined_loss.1} parent=19 // pred_fallthru
            _
          %191 = vnop
        $region20: #{combined_loss.1} parent=15 // pred_fallthru
          _
        // Predicated region
        $region55: #{combined_loss.1} parent=15 // pred_check
          %p192 = pneg %p70
        $region56: #{combined_loss.1} parent=15 // pred_check_branch
          %194 = sbr.rel (%p192) target = $region58
        $region57: #{combined_loss.1} parent=15 // pred_region
          %s195 = sand.u32 %s60, 1
          %s196 = sand.u32 %s60, 1
          %s197 = smul.addr %s196, 16
          %s198 = scalar_lea.vmem [#allocation4], %s197
          %s199 = sadd.s32 %s15, %s16
          %s200 = smul.addr %s199, 8
          %s201 = scalar_lea.vmem %s1, %s200
          // Predicated region
          $region59: #{combined_loss.1} parent=57 // pred_check
            _
          $region60: #{combined_loss.1} parent=57 // pred_check_branch
            %203 = sbr.rel (0) target = $region62
          $region61: #{combined_loss.1} parent=57 // pred_region
            // Predicated region
            $region63: #{combined_loss.1} parent=61 // pred_check
              _
            $region64: #{combined_loss.1} parent=61 // pred_check_branch
              %205 = sbr.rel (0) target = $region66
            $region65: #{combined_loss.1} parent=61 // pred_region
              // Predicated region
              $region78: #{combined_loss.1} parent=65 // pred_check
                _
              $region79: #{combined_loss.1} parent=65 // pred_check_branch
                %223 = sbr.rel (0) target = $region81
              $region80: #{combined_loss.1} parent=65 // pred_region
                loop: start=0, step=1, limit=1
                $region82: #{combined_loss.1} parent=80 // loop_pre_header
                  _
                $region83: #{combined_loss.1} parent=80 // loop_header
                  %s225 = sphi 0, %s229
                  %p226 = scmp.ge.s32.totalorder %s225, 1
                  %s230 = sphi %s201, %s201
                  %s231 = sphi %s198, %s198
                $region84: #{combined_loss.1} parent=80 // loop_header_branch
                  %228 = sbr.rel (%p226) target = $region88
                $region85: #{combined_loss.1} parent=80 // loop_body
                  %v232 = vld [vmem:[%s230] sm:$0xff]
                  %233 = vst [vmem:[%s231] sm:$0xff] %v232
                  %v234 = vld [vmem:[%s230 + $0x10] sm:$0xff]
                  %235 = vst [vmem:[%s231 + $0x8] sm:$0xff] %v234
                $region86: #{combined_loss.1} parent=80 // loop_footer
                  %s229 = sadd.s32 1, %s225
                $region87: #{combined_loss.1} parent=80 // loop_footer_branch
                  %224 = sbr.rel target = $region83
                $region88: #{combined_loss.1} parent=80 // loop_exit
                  _
              $region81: #{combined_loss.1} parent=65 // pred_fallthru
                _
              // Predicated region
              $region89: #{combined_loss.1} parent=65 // pred_check
                _
              $region90: #{combined_loss.1} parent=65 // pred_check_branch
                %237 = sbr.rel target = $region92
              $region91: #{combined_loss.1} parent=65 // pred_region
                _
              $region92: #{combined_loss.1} parent=65 // pred_fallthru
                _
            $region66: #{combined_loss.1} parent=61 // pred_fallthru
              _
            // Predicated region
            $region67: #{combined_loss.1} parent=61 // pred_check
              _
            $region68: #{combined_loss.1} parent=61 // pred_check_branch
              %207 = sbr.rel target = $region70
            $region69: #{combined_loss.1} parent=61 // pred_region
              %s209 = ssub.s32 256, 1
              loop: start=0, step=1, limit=1
              $region71: #{combined_loss.1} parent=69 // loop_pre_header
                _
              $region72: #{combined_loss.1} parent=69 // loop_header
                %s211 = sphi 0, %s215
                %p212 = scmp.ge.s32.totalorder %s211, 1
                %s216 = sphi %s201, %s201
                %s217 = sphi %s198, %s198
              $region73: #{combined_loss.1} parent=69 // loop_header_branch
                %214 = sbr.rel (%p212) target = $region77
              $region74: #{combined_loss.1} parent=69 // loop_body
                %v218 = vld [vmem:[%s216] sm:%s209]
                %219 = vst [vmem:[%s217] sm:%s209] %v218
                %v220 = vld [vmem:[%s216 + $0x10] sm:%s209]
                %221 = vst [vmem:[%s217 + $0x8] sm:%s209] %v220
              $region75: #{combined_loss.1} parent=69 // loop_footer
                %s215 = sadd.s32 1, %s211
              $region76: #{combined_loss.1} parent=69 // loop_footer_branch
                %210 = sbr.rel target = $region72
              $region77: #{combined_loss.1} parent=69 // loop_exit
                _
            $region70: #{combined_loss.1} parent=61 // pred_fallthru
              _
          $region62: #{combined_loss.1} parent=57 // pred_fallthru
            _
          %238 = vnop
        $region58: #{combined_loss.1} parent=15 // pred_fallthru
          _
      $region16: #{combined_loss.1} parent=5 // pred_fallthru
        _
      %p239 = scmp.le.s32.totalorder 1, %s8
      %p240 = scmp.lt.s32.totalorder %s8, 3
      %p241 = pnand %p239, %p240
      %p242 = pneg %p241
      // Predicated region
      $region93: #{combined_loss.1} parent=5 // pred_check
        _
      $region94: #{combined_loss.1} parent=5 // pred_check_branch
        %244 = sbr.rel (%p241) target = $region96
      $region95: #{combined_loss.1} parent=5 // pred_region
        %s245 = ssub.s32 %s8, 1
        %s246 = sand.u32 %s35, 1
        %s247 = sand.u32 %s35, 1
        %s248 = smul.addr %s247, 64
        %s249 = scalar_lea.vmem [#allocation3], %s248
        // Predicated region
        $region97: #{combined_loss.1} parent=95 // pred_check
          %p250 = pneg %p48
        $region98: #{combined_loss.1} parent=95 // pred_check_branch
          %252 = sbr.rel (%p250) target = $region100
        $region99: #{combined_loss.1} parent=95 // pred_region
          _
        $region100: #{combined_loss.1} parent=95 // pred_fallthru
          _
        %s253 = sand.u32 %s63, 1
        %s254 = sand.u32 %s63, 1
        %s255 = smul.addr %s254, 16
        %s256 = scalar_lea.vmem [#allocation4], %s255
        // Predicated region
        $region101: #{combined_loss.1} parent=95 // pred_check
          %p257 = pneg %p76
        $region102: #{combined_loss.1} parent=95 // pred_check_branch
          %259 = sbr.rel (%p257) target = $region104
        $region103: #{combined_loss.1} parent=95 // pred_region
          _
        $region104: #{combined_loss.1} parent=95 // pred_fallthru
          _
        %s260 = sand.u32 %s35, 1
        %s261 = sand.u32 %s35, 1
        %s262 = smul.addr %s261, 64
        %s263 = scalar_lea.vmem [#allocation3], %s262
        %p264 = pneg %p48
        %p265 = pneg %p45
        %s266 = sand.u32 %s63, 1
        %s267 = sand.u32 %s63, 1
        %s268 = smul.addr %s267, 16
        %s269 = scalar_lea.vmem [#allocation4], %s268
        %p270 = pneg %p76
        %p271 = pneg %p73
        %p272 = pneg %p102
        %p273 = pneg %p99
        %p274 = scmp.lt.s32.totalorder %s17, 1
        %s275 = scalar_select %p274, %s17, 1
        %s276 = smul.addr %s275, 4
        %s277 = smul.addr %s276, 8
        %s278 = scalar_lea.vmem %s2, %s277
        %s279 = sadd.s32 %s17, %s18
        %s280 = sadd.s32 %s17, %s18
        %p281 = scmp.lt.s32.totalorder %s17, 1
        %s282 = scalar_select %p281, %s17, 1
        %s283 = smul.addr %s282, 4
        %s284 = smul.addr %s283, 8
        %s285 = scalar_lea.vmem %s2, %s284
        %s286 = sadd.s32 %s17, %s18
        %p287 = scmp.eq.s32.totalorder %s18, 0
        // Predicated region
        $region105: #{combined_loss.1} parent=95 // pred_check
          %p288 = pneg %p287
        $region106: #{combined_loss.1} parent=95 // pred_check_branch
          %290 = sbr.rel (%p288) target = $region108
        $region107: #{combined_loss.1} parent=95 // pred_region
          %291 = vst [vmem:[#allocation2] sm:$0xff] 0.0
          %292 = vst [vmem:[#allocation2 + $0x8] sm:$0xff] 0.0
          %293 = vst [vmem:[#allocation2 + $0x10] sm:$0xff] 0.0
          %294 = vst [vmem:[#allocation2 + $0x18] sm:$0xff] 0.0
        $region108: #{combined_loss.1} parent=95 // pred_fallthru
          _
        %s295 = sadd.s32 %s286, 1
        %s296 = smul.u32 %s295, 1024
        %p297 = scmp.gt.s32.totalorder %s296, 256
        // Predicated region
        $region109: #{combined_loss.1} parent=95 // pred_check
          %p298 = pneg %p297
        $region110: #{combined_loss.1} parent=95 // pred_check_branch
          %300 = sbr.rel (%p298) target = $region112
        $region111: #{combined_loss.1} parent=95 // pred_region
          %v301 = vld [vmem:[%s249] sm:$0xff]
          %v302 = vld [vmem:[%s249 + $0x8] sm:$0xff]
          %v303 = vld [vmem:[%s249 + $0x10] sm:$0xff]
          %v304 = vld [vmem:[%s249 + $0x18] sm:$0xff]
          %v305 = vld [vmem:[%s249 + $0x20] sm:$0xff]
          %v306 = vld [vmem:[%s249 + $0x28] sm:$0xff]
          %v307 = vld [vmem:[%s249 + $0x30] sm:$0xff]
          %v308 = vld [vmem:[%s249 + $0x38] sm:$0xff]
          %v309 = vld [vmem:[%s256] sm:$0xff]
          %v310 = vld [vmem:[%s256 + $0x8] sm:$0xff]
          %vm311 = vcmp.eq.s32.totalorder %v309, 0
          %vm312 = vcmp.eq.s32.totalorder %v309, 1
          %vm313 = vcmp.eq.s32.totalorder %v309, 2
          %vm314 = vcmp.eq.s32.totalorder %v309, 3
          %vm315 = vcmp.eq.s32.totalorder %v310, 0
          %vm316 = vcmp.eq.s32.totalorder %v310, 1
          %vm317 = vcmp.eq.s32.totalorder %v310, 2
          %vm318 = vcmp.eq.s32.totalorder %v310, 3
          %v319 = vsel %vm311, 1, 0
          %v320 = vsel %vm312, 1, 0
          %v321 = vsel %vm313, 1, 0
          %v322 = vsel %vm314, 1, 0
          %v323 = vsel %vm315, 1, 0
          %v324 = vsel %vm316, 1, 0
          %v325 = vsel %vm317, 1, 0
          %v326 = vsel %vm318, 1, 0
          %v327 = vcvt.s32.f32 %v319
          %v328 = vcvt.s32.f32 %v320
          %v329 = vcvt.s32.f32 %v321
          %v330 = vcvt.s32.f32 %v322
          %v331 = vcvt.s32.f32 %v323
          %v332 = vcvt.s32.f32 %v324
          %v333 = vcvt.s32.f32 %v325
          %v334 = vcvt.s32.f32 %v326
          %v335 = vmax.f32 %v301, %v303
          %v336 = vmax.f32 %v302, %v304
          %v337 = vmax.f32 %v335, %v336
          %v338 = vmax.f32 %v305, %v307
          %v339 = vmax.f32 %v306, %v308
          %v340 = vmax.f32 %v338, %v339
          %v341 = vsub.f32 %v301, %v337
          %v342 = vsub.f32 %v302, %v337
          %v343 = vsub.f32 %v303, %v337
          %v344 = vsub.f32 %v304, %v337
          %v345 = vsub.f32 %v305, %v340
          %v346 = vsub.f32 %v306, %v340
          %v347 = vsub.f32 %v307, %v340
          %v348 = vsub.f32 %v308, %v340
          %v349 = vmul.f32 %v341, 1.442695
          %v350 = vpow.pop %v349
          %v351 = vmul.f32 %v342, 1.442695
          %v352 = vpow.pop %v351
          %v353 = vmul.f32 %v343, 1.442695
          %v354 = vpow.pop %v353
          %v355 = vmul.f32 %v344, 1.442695
          %v356 = vpow.pop %v355
          %v357 = vmul.f32 %v345, 1.442695
          %v358 = vpow.pop %v357
          %v359 = vmul.f32 %v346, 1.442695
          %v360 = vpow.pop %v359
          %v361 = vmul.f32 %v347, 1.442695
          %v362 = vpow.pop %v361
          %v363 = vmul.f32 %v348, 1.442695
          %v364 = vpow.pop %v363
          %v365 = vadd.f32 %v350, %v352
          %v366 = vadd.f32 %v365, %v354
          %v367 = vadd.f32 %v366, %v356
          %v368 = vadd.f32 %v358, %v360
          %v369 = vadd.f32 %v368, %v362
          %v370 = vadd.f32 %v369, %v364
          %v371 = vrcp.pop %v367
          %v372 = vrcp.pop %v370
          %v373 = vmul.f32 %v350, %v371
          %v374 = vmul.f32 %v352, %v371
          %v375 = vmul.f32 %v354, %v371
          %v376 = vmul.f32 %v356, %v371
          %v377 = vmul.f32 %v358, %v372
          %v378 = vmul.f32 %v360, %v372
          %v379 = vmul.f32 %v362, %v372
          %v380 = vmul.f32 %v364, %v372
          %v381 = vlog2.pop %v367
          %v382 = vmul.f32 %v381, 0.6931472
          %v383 = vlog2.pop %v370
          %v384 = vmul.f32 %v383, 0.6931472
          %vm385 = vcmp.ge.s32.totalorder %v309, 0
          %vm386 = vcmp.ge.s32.totalorder %v310, 0
          %v387 = vsel %vm385, 1, 0
          %v388 = vsel %vm386, 1, 0
          %v389 = vcvt.s32.f32 %v387
          %v390 = vcvt.s32.f32 %v388
          %v391 = vmul.f32 %v373, %v389
          %v392 = vmul.f32 %v374, %v389
          %v393 = vmul.f32 %v375, %v389
          %v394 = vmul.f32 %v376, %v389
          %v395 = vmul.f32 %v377, %v390
          %v396 = vmul.f32 %v378, %v390
          %v397 = vmul.f32 %v379, %v390
          %v398 = vmul.f32 %v380, %v390
          %v399 = vmul.f32 %v382, %v389
          %v400 = vmul.f32 %v384, %v390
          %v401 = vmul.f32 %v327, %v341
          %v402 = vmul.f32 %v328, %v342
          %v403 = vmul.f32 %v329, %v343
          %v404 = vmul.f32 %v330, %v344
          %v405 = vmul.f32 %v331, %v345
          %v406 = vmul.f32 %v332, %v346
          %v407 = vmul.f32 %v333, %v347
          %v408 = vmul.f32 %v334, %v348
          %v409 = vadd.f32 %v401, %v402
          %v410 = vadd.f32 %v409, %v403
          %v411 = vadd.f32 %v410, %v404
          %v412 = vadd.f32 %v411, %v405
          %v413 = vadd.f32 %v412, %v406
          %v414 = vadd.f32 %v413, %v407
          %v415 = vadd.f32 %v414, %v408
          %v416 = vrot.slane %v415, 4
          %v417 = vadd.f32 %v415, %v416
          %v418 = vrot.slane %v417, 2
          %v419 = vadd.f32 %v417, %v418
          %v420 = vrot.slane %v419, 1
          %v421 = vadd.f32 %v419, %v420
          %v422 = vadd.f32 %v399, %v400
          %v423 = vrot.slane %v422, 4
          %v424 = vadd.f32 %v422, %v423
          %v425 = vrot.slane %v424, 2
          %v426 = vadd.f32 %v424, %v425
          %v427 = vrot.slane %v426, 1
          %v428 = vadd.f32 %v426, %v427
          %v429 = vmul.f32 %v391, %v327
          %v430 = vmul.f32 %v392, %v328
          %v431 = vmul.f32 %v393, %v329
          %v432 = vmul.f32 %v394, %v330
          %v433 = vmul.f32 %v395, %v331
          %v434 = vmul.f32 %v396, %v332
          %v435 = vmul.f32 %v397, %v333
          %v436 = vmul.f32 %v398, %v334
          %v437 = vadd.f32 %v429, %v433
          %v438 = vadd.f32 %v430, %v434
          %v439 = vadd.f32 %v431, %v435
          %v440 = vadd.f32 %v432, %v436
          %v441 = vrot.slane %v437, 4
          %v442 = vadd.f32 %v437, %v441
          %v443 = vrot.slane %v442, 2
          %v444 = vadd.f32 %v442, %v443
          %v445 = vrot.slane %v444, 1
          %v446 = vadd.f32 %v444, %v445
          %v447 = vrot.slane %v438, 4
          %v448 = vadd.f32 %v438, %v447
          %v449 = vrot.slane %v448, 2
          %v450 = vadd.f32 %v448, %v449
          %v451 = vrot.slane %v450, 1
          %v452 = vadd.f32 %v450, %v451
          %v453 = vrot.slane %v439, 4
          %v454 = vadd.f32 %v439, %v453
          %v455 = vrot.slane %v454, 2
          %v456 = vadd.f32 %v454, %v455
          %v457 = vrot.slane %v456, 1
          %v458 = vadd.f32 %v456, %v457
          %v459 = vrot.slane %v440, 4
          %v460 = vadd.f32 %v440, %v459
          %v461 = vrot.slane %v460, 2
          %v462 = vadd.f32 %v460, %v461
          %v463 = vrot.slane %v462, 1
          %v464 = vadd.f32 %v462, %v463
          %v465 = vadd.f32 %v391, %v395
          %v466 = vadd.f32 %v392, %v396
          %v467 = vadd.f32 %v393, %v397
          %v468 = vadd.f32 %v394, %v398
          %v469 = vrot.slane %v465, 4
          %v470 = vadd.f32 %v465, %v469
          %v471 = vrot.slane %v470, 2
          %v472 = vadd.f32 %v470, %v471
          %v473 = vrot.slane %v472, 1
          %v474 = vadd.f32 %v472, %v473
          %v475 = vrot.slane %v466, 4
          %v476 = vadd.f32 %v466, %v475
          %v477 = vrot.slane %v476, 2
          %v478 = vadd.f32 %v476, %v477
          %v479 = vrot.slane %v478, 1
          %v480 = vadd.f32 %v478, %v479
          %v481 = vrot.slane %v467, 4
          %v482 = vadd.f32 %v467, %v481
          %v483 = vrot.slane %v482, 2
          %v484 = vadd.f32 %v482, %v483
          %v485 = vrot.slane %v484, 1
          %v486 = vadd.f32 %v484, %v485
          %v487 = vrot.slane %v468, 4
          %v488 = vadd.f32 %v468, %v487
          %v489 = vrot.slane %v488, 2
          %v490 = vadd.f32 %v488, %v489
          %v491 = vrot.slane %v490, 1
          %v492 = vadd.f32 %v490, %v491
          %v493 = vadd.f32 %v327, %v331
          %v494 = vadd.f32 %v328, %v332
          %v495 = vadd.f32 %v329, %v333
          %v496 = vadd.f32 %v330, %v334
          %v497 = vrot.slane %v493, 4
          %v498 = vadd.f32 %v493, %v497
          %v499 = vrot.slane %v498, 2
          %v500 = vadd.f32 %v498, %v499
          %v501 = vrot.slane %v500, 1
          %v502 = vadd.f32 %v500, %v501
          %v503 = vrot.slane %v494, 4
          %v504 = vadd.f32 %v494, %v503
          %v505 = vrot.slane %v504, 2
          %v506 = vadd.f32 %v504, %v505
          %v507 = vrot.slane %v506, 1
          %v508 = vadd.f32 %v506, %v507
          %v509 = vrot.slane %v495, 4
          %v510 = vadd.f32 %v495, %v509
          %v511 = vrot.slane %v510, 2
          %v512 = vadd.f32 %v510, %v511
          %v513 = vrot.slane %v512, 1
          %v514 = vadd.f32 %v512, %v513
          %v515 = vrot.slane %v496, 4
          %v516 = vadd.f32 %v496, %v515
          %v517 = vrot.slane %v516, 2
          %v518 = vadd.f32 %v516, %v517
          %v519 = vrot.slane %v518, 1
          %v520 = vadd.f32 %v518, %v519
          %v521 = vld [vmem:[#allocation2] sm:$0xf]
          %vm526 = vcmask 1041409
          %v527 = vsel %vm526, %v452, %v446
          %vm528 = vcmask 1042434
          %v529 = vsel %vm528, %v458, %v527
          %vm530 = vcmask 1043459
          %v531 = vsel %vm530, %v464, %v529
          %v533 = vadd.f32 %v521, %v531
          %534 = vst [vmem:[#allocation2] sm:$0xf] %v533
          %v535 = vld [vmem:[#allocation2 + $0x8] sm:$0xf]
          %v540 = vsel %vm526, %v480, %v474
          %v541 = vsel %vm528, %v486, %v540
          %v542 = vsel %vm530, %v492, %v541
          %v544 = vadd.f32 %v535, %v542
          %545 = vst [vmem:[#allocation2 + $0x8] sm:$0xf] %v544
          %v546 = vld [vmem:[#allocation2 + $0x10] sm:$0xf]
          %v551 = vsel %vm526, %v508, %v502
          %v552 = vsel %vm528, %v514, %v551
          %v553 = vsel %vm530, %v520, %v552
          %v555 = vadd.f32 %v546, %v553
          %556 = vst [vmem:[#allocation2 + $0x10] sm:$0xf] %v555
          %v557 = vld [vmem:[#allocation2 + $0x18] sm:$0x1]
          %v558 = vsub.f32 %v421, %v428
          %v559 = vadd.f32 %v557, %v558
          %560 = vst [vmem:[#allocation2 + $0x18] sm:$0x1] %v559
        $region112: #{combined_loss.1} parent=95 // pred_fallthru
          _
        %p561 = scmp.le.s32.totalorder %s296, 256
        // Predicated region
        $region113: #{combined_loss.1} parent=95 // pred_check
          %p562 = pneg %p561
        $region114: #{combined_loss.1} parent=95 // pred_check_branch
          %564 = sbr.rel (%p562) target = $region116
        $region115: #{combined_loss.1} parent=95 // pred_region
          %v565 = vld [vmem:[%s249] sm:$0xff]
          %v566 = vld [vmem:[%s249 + $0x8] sm:$0xff]
          %v567 = vld [vmem:[%s249 + $0x10] sm:$0xff]
          %v568 = vld [vmem:[%s249 + $0x18] sm:$0xff]
          %v569 = vld [vmem:[%s249 + $0x20] sm:$0xff]
          %v570 = vld [vmem:[%s249 + $0x28] sm:$0xff]
          %v571 = vld [vmem:[%s249 + $0x30] sm:$0xff]
          %v572 = vld [vmem:[%s249 + $0x38] sm:$0xff]
          %v573 = vld [vmem:[%s256] sm:$0xff]
          %v574 = vld [vmem:[%s256 + $0x8] sm:$0xff]
          %vm575 = vcmp.eq.s32.totalorder %v573, 0
          %vm576 = vcmp.eq.s32.totalorder %v573, 1
          %vm577 = vcmp.eq.s32.totalorder %v573, 2
          %vm578 = vcmp.eq.s32.totalorder %v573, 3
          %vm579 = vcmp.eq.s32.totalorder %v574, 0
          %vm580 = vcmp.eq.s32.totalorder %v574, 1
          %vm581 = vcmp.eq.s32.totalorder %v574, 2
          %vm582 = vcmp.eq.s32.totalorder %v574, 3
          %v583 = vsel %vm575, 1, 0
          %v584 = vsel %vm576, 1, 0
          %v585 = vsel %vm577, 1, 0
          %v586 = vsel %vm578, 1, 0
          %v587 = vsel %vm579, 1, 0
          %v588 = vsel %vm580, 1, 0
          %v589 = vsel %vm581, 1, 0
          %v590 = vsel %vm582, 1, 0
          %v591 = vcvt.s32.f32 %v583
          %v592 = vcvt.s32.f32 %v584
          %v593 = vcvt.s32.f32 %v585
          %v594 = vcvt.s32.f32 %v586
          %v595 = vcvt.s32.f32 %v587
          %v596 = vcvt.s32.f32 %v588
          %v597 = vcvt.s32.f32 %v589
          %v598 = vcvt.s32.f32 %v590
          %v599 = vmax.f32 %v565, %v567
          %v600 = vmax.f32 %v566, %v568
          %v601 = vmax.f32 %v599, %v600
          %v602 = vmax.f32 %v569, %v571
          %v603 = vmax.f32 %v570, %v572
          %v604 = vmax.f32 %v602, %v603
          %v605 = vsub.f32 %v565, %v601
          %v606 = vsub.f32 %v566, %v601
          %v607 = vsub.f32 %v567, %v601
          %v608 = vsub.f32 %v568, %v601
          %v609 = vsub.f32 %v569, %v604
          %v610 = vsub.f32 %v570, %v604
          %v611 = vsub.f32 %v571, %v604
          %v612 = vsub.f32 %v572, %v604
          %v613 = vmul.f32 %v605, 1.442695
          %v614 = vpow.pop %v613
          %v615 = vmul.f32 %v606, 1.442695
          %v616 = vpow.pop %v615
          %v617 = vmul.f32 %v607, 1.442695
          %v618 = vpow.pop %v617
          %v619 = vmul.f32 %v608, 1.442695
          %v620 = vpow.pop %v619
          %v621 = vmul.f32 %v609, 1.442695
          %v622 = vpow.pop %v621
          %v623 = vmul.f32 %v610, 1.442695
          %v624 = vpow.pop %v623
          %v625 = vmul.f32 %v611, 1.442695
          %v626 = vpow.pop %v625
          %v627 = vmul.f32 %v612, 1.442695
          %v628 = vpow.pop %v627
          %v629 = vadd.f32 %v614, %v616
          %v630 = vadd.f32 %v629, %v618
          %v631 = vadd.f32 %v630, %v620
          %v632 = vadd.f32 %v622, %v624
          %v633 = vadd.f32 %v632, %v626
          %v634 = vadd.f32 %v633, %v628
          %v635 = vrcp.pop %v631
          %v636 = vrcp.pop %v634
          %v637 = vmul.f32 %v614, %v635
          %v638 = vmul.f32 %v616, %v635
          %v639 = vmul.f32 %v618, %v635
          %v640 = vmul.f32 %v620, %v635
          %v641 = vmul.f32 %v622, %v636
          %v642 = vmul.f32 %v624, %v636
          %v643 = vmul.f32 %v626, %v636
          %v644 = vmul.f32 %v628, %v636
          %v645 = vlog2.pop %v631
          %v646 = vmul.f32 %v645, 0.6931472
          %v647 = vlog2.pop %v634
          %v648 = vmul.f32 %v647, 0.6931472
          %v649 = vmul.f32 %v591, %v605
          %v650 = vmul.f32 %v592, %v606
          %v651 = vmul.f32 %v593, %v607
          %v652 = vmul.f32 %v594, %v608
          %v653 = vmul.f32 %v595, %v609
          %v654 = vmul.f32 %v596, %v610
          %v655 = vmul.f32 %v597, %v611
          %v656 = vmul.f32 %v598, %v612
          %v657 = vadd.f32 %v649, %v650
          %v658 = vadd.f32 %v657, %v651
          %v659 = vadd.f32 %v658, %v652
          %v660 = vadd.f32 %v659, %v653
          %v661 = vadd.f32 %v660, %v654
          %v662 = vadd.f32 %v661, %v655
          %v663 = vadd.f32 %v662, %v656
          %v664 = vrot.slane %v663, 4
          %v665 = vadd.f32 %v663, %v664
          %v666 = vrot.slane %v665, 2
          %v667 = vadd.f32 %v665, %v666
          %v668 = vrot.slane %v667, 1
          %v669 = vadd.f32 %v667, %v668
          %v670 = vadd.f32 %v646, %v648
          %v671 = vrot.slane %v670, 4
          %v672 = vadd.f32 %v670, %v671
          %v673 = vrot.slane %v672, 2
          %v674 = vadd.f32 %v672, %v673
          %v675 = vrot.slane %v674, 1
          %v676 = vadd.f32 %v674, %v675
          %v677 = vmul.f32 %v637, %v591
          %v678 = vmul.f32 %v638, %v592
          %v679 = vmul.f32 %v639, %v593
          %v680 = vmul.f32 %v640, %v594
          %v681 = vmul.f32 %v641, %v595
          %v682 = vmul.f32 %v642, %v596
          %v683 = vmul.f32 %v643, %v597
          %v684 = vmul.f32 %v644, %v598
          %v685 = vadd.f32 %v677, %v681
          %v686 = vadd.f32 %v678, %v682
          %v687 = vadd.f32 %v679, %v683
          %v688 = vadd.f32 %v680, %v684
          %v689 = vrot.slane %v685, 4
          %v690 = vadd.f32 %v685, %v689
          %v691 = vrot.slane %v690, 2
          %v692 = vadd.f32 %v690, %v691
          %v693 = vrot.slane %v692, 1
          %v694 = vadd.f32 %v692, %v693
          %v695 = vrot.slane %v686, 4
          %v696 = vadd.f32 %v686, %v695
          %v697 = vrot.slane %v696, 2
          %v698 = vadd.f32 %v696, %v697
          %v699 = vrot.slane %v698, 1
          %v700 = vadd.f32 %v698, %v699
          %v701 = vrot.slane %v687, 4
          %v702 = vadd.f32 %v687, %v701
          %v703 = vrot.slane %v702, 2
          %v704 = vadd.f32 %v702, %v703
          %v705 = vrot.slane %v704, 1
          %v706 = vadd.f32 %v704, %v705
          %v707 = vrot.slane %v688, 4
          %v708 = vadd.f32 %v688, %v707
          %v709 = vrot.slane %v708, 2
          %v710 = vadd.f32 %v708, %v709
          %v711 = vrot.slane %v710, 1
          %v712 = vadd.f32 %v710, %v711
          %v713 = vadd.f32 %v637, %v641
          %v714 = vadd.f32 %v638, %v642
          %v715 = vadd.f32 %v639, %v643
          %v716 = vadd.f32 %v640, %v644
          %v717 = vrot.slane %v713, 4
          %v718 = vadd.f32 %v713, %v717
          %v719 = vrot.slane %v718, 2
          %v720 = vadd.f32 %v718, %v719
          %v721 = vrot.slane %v720, 1
          %v722 = vadd.f32 %v720, %v721
          %v723 = vrot.slane %v714, 4
          %v724 = vadd.f32 %v714, %v723
          %v725 = vrot.slane %v724, 2
          %v726 = vadd.f32 %v724, %v725
          %v727 = vrot.slane %v726, 1
          %v728 = vadd.f32 %v726, %v727
          %v729 = vrot.slane %v715, 4
          %v730 = vadd.f32 %v715, %v729
          %v731 = vrot.slane %v730, 2
          %v732 = vadd.f32 %v730, %v731
          %v733 = vrot.slane %v732, 1
          %v734 = vadd.f32 %v732, %v733
          %v735 = vrot.slane %v716, 4
          %v736 = vadd.f32 %v716, %v735
          %v737 = vrot.slane %v736, 2
          %v738 = vadd.f32 %v736, %v737
          %v739 = vrot.slane %v738, 1
          %v740 = vadd.f32 %v738, %v739
          %v741 = vadd.f32 %v591, %v595
          %v742 = vadd.f32 %v592, %v596
          %v743 = vadd.f32 %v593, %v597
          %v744 = vadd.f32 %v594, %v598
          %v745 = vrot.slane %v741, 4
          %v746 = vadd.f32 %v741, %v745
          %v747 = vrot.slane %v746, 2
          %v748 = vadd.f32 %v746, %v747
          %v749 = vrot.slane %v748, 1
          %v750 = vadd.f32 %v748, %v749
          %v751 = vrot.slane %v742, 4
          %v752 = vadd.f32 %v742, %v751
          %v753 = vrot.slane %v752, 2
          %v754 = vadd.f32 %v752, %v753
          %v755 = vrot.slane %v754, 1
          %v756 = vadd.f32 %v754, %v755
          %v757 = vrot.slane %v743, 4
          %v758 = vadd.f32 %v743, %v757
          %v759 = vrot.slane %v758, 2
          %v760 = vadd.f32 %v758, %v759
          %v761 = vrot.slane %v760, 1
          %v762 = vadd.f32 %v760, %v761
          %v763 = vrot.slane %v744, 4
          %v764 = vadd.f32 %v744, %v763
          %v765 = vrot.slane %v764, 2
          %v766 = vadd.f32 %v764, %v765
          %v767 = vrot.slane %v766, 1
          %v768 = vadd.f32 %v766, %v767
          %v769 = vld [vmem:[#allocation2] sm:$0xf]
          %vm774 = vcmask 1041409
          %v775 = vsel %vm774, %v700, %v694
          %vm776 = vcmask 1042434
          %v777 = vsel %vm776, %v706, %v775
          %vm778 = vcmask 1043459
          %v779 = vsel %vm778, %v712, %v777
          %v781 = vadd.f32 %v769, %v779
          %782 = vst [vmem:[#allocation2] sm:$0xf] %v781
          %v783 = vld [vmem:[#allocation2 + $0x8] sm:$0xf]
          %v788 = vsel %vm774, %v728, %v722
          %v789 = vsel %vm776, %v734, %v788
          %v790 = vsel %vm778, %v740, %v789
          %v792 = vadd.f32 %v783, %v790
          %793 = vst [vmem:[#allocation2 + $0x8] sm:$0xf] %v792
          %v794 = vld [vmem:[#allocation2 + $0x10] sm:$0xf]
          %v799 = vsel %vm774, %v756, %v750
          %v800 = vsel %vm776, %v762, %v799
          %v801 = vsel %vm778, %v768, %v800
          %v803 = vadd.f32 %v794, %v801
          %804 = vst [vmem:[#allocation2 + $0x10] sm:$0xf] %v803
          %v805 = vld [vmem:[#allocation2 + $0x18] sm:$0x1]
          %v806 = vsub.f32 %v669, %v676
          %v807 = vadd.f32 %v805, %v806
          %808 = vst [vmem:[#allocation2 + $0x18] sm:$0x1] %v807
        $region116: #{combined_loss.1} parent=95 // pred_fallthru
          _
        // Predicated region
        $region117: #{combined_loss.1} parent=95 // pred_check
          %p809 = pneg %p287
        $region118: #{combined_loss.1} parent=95 // pred_check_branch
          %811 = sbr.rel (%p809) target = $region120
        $region119: #{combined_loss.1} parent=95 // pred_region
          %v812 = vld [vmem:[#allocation2] sm:$0xff]
          %v813 = vld [vmem:[#allocation2 + $0x8] sm:$0xff]
          %v814 = vld [vmem:[#allocation2 + $0x10] sm:$0xff]
          %v815 = vld [vmem:[#allocation2 + $0x18] sm:$0xff]
          %816 = vst [vmem:[%s285] sm:$0xff] %v812
          %817 = vst [vmem:[%s285 + $0x8] sm:$0xff] %v813
          %818 = vst [vmem:[%s285 + $0x10] sm:$0xff] %v814
          %819 = vst [vmem:[%s285 + $0x18] sm:$0xff] %v815
        $region120: #{combined_loss.1} parent=95 // pred_fallthru
          _
        %p820 = scmp.lt.s32.totalorder %s17, 1
        %s821 = scalar_select %p820, %s17, 1
        %s822 = smul.addr %s821, 4
        %s823 = smul.addr %s822, 8
        %s824 = scalar_lea.vmem %s2, %s823
        // Predicated region
        $region121: #{combined_loss.1} parent=95 // pred_check
          %p825 = pneg %p99
        $region122: #{combined_loss.1} parent=95 // pred_check_branch
          %827 = sbr.rel (%p825) target = $region124
        $region123: #{combined_loss.1} parent=95 // pred_region
          _
        $region124: #{combined_loss.1} parent=95 // pred_fallthru
          _
      $region96: #{combined_loss.1} parent=5 // pred_fallthru
        _
      %p828 = scmp.le.s32.totalorder 2, %s8
      // Predicated region
      $region125: #{combined_loss.1} parent=5 // pred_check
        %p829 = pneg %p828
      $region126: #{combined_loss.1} parent=5 // pred_check_branch
        %831 = sbr.rel (%p829) target = $region128
      $region127: #{combined_loss.1} parent=5 // pred_region
        %s832 = ssub.s32 %s8, 2
        // Predicated region
        $region129: #{combined_loss.1} parent=127 // pred_check
          %p833 = pneg %p105
        $region130: #{combined_loss.1} parent=127 // pred_check_branch
          %835 = sbr.rel (%p833) target = $region132
        $region131: #{combined_loss.1} parent=127 // pred_region
          %p836 = scmp.lt.s32.totalorder %s19, 1
          %s837 = scalar_select %p836, %s19, 1
          %s838 = smul.addr %s837, 4
          %s839 = smul.addr %s838, 8
          %s840 = scalar_lea.vmem %s2, %s839
        $region132: #{combined_loss.1} parent=127 // pred_fallthru
          _
      $region128: #{combined_loss.1} parent=5 // pred_fallthru
        _
    $region6: #{combined_loss.1} parent=1 // loop_footer
      %s12 = sadd.s32 1, %s8
    $region7: #{combined_loss.1} parent=1 // loop_footer_branch
      %7 = sbr.rel target = $region3
    $region8: #{combined_loss.1} parent=1 // loop_exit
      _

</llo_original>
